<compile_context>
chip_gen: v7x
topology: tpu7x:2x2x1
jax: 0.10.0
libtpu: 0.0.40
codegen_flags: <defaults>
</compile_context>

<pallas_src>
import jax
import jax.numpy as jnp
from jax.experimental import pallas as pl
from jax.experimental.pallas import tpu as pltpu


def _edge_sigmoid_kernel(params_ref, x_ref, o_ref):
    # params_ref: SMEM (J, 2) f32 scalar-prefetch table:  y_j = 0.5*tanh(a_j*x + b_j) + 0.5
    # x_ref:      VMEM (tile_r, lane) f32 input tile (loaded once, reused for all J MFs)
    # o_ref:      VMEM (J, tile_r, lane) f32 output slabs
    xv = x_ref[...]
    num_mfs = o_ref.shape[0]
    for j in range(num_mfs):  # J is small & static -> unrolled
        a = params_ref[j, 0]
        b = params_ref[j, 1]
        # tanh-based sigmoid: one EUP push per vreg, no divide, no inf intermediates.
        o_ref[j, :, :] = 0.5 * jnp.tanh(xv * a + b) + 0.5


def _round_up(n, m):
    return ((n + m - 1) // m) * m


def _fold_affine_params(*, c, s, center_width, side_width, width_constrain,
                        min_slope, right_side=False):
    """Fold the scalar parameter algebra into (a, b) with sigmoid(z) = 0.5*tanh(a*x+b)+0.5."""
    d = jnp.float32(1.0 if right_side else -1.0)
    s32 = jnp.asarray(s, jnp.float32)
    ms32 = jnp.asarray(min_slope, jnp.float32)
    s_eff = jnp.abs(s32 - ms32) + ms32
    m_s = jnp.asarray(width_constrain, jnp.float32) / s_eff
    cw = jnp.abs(jnp.asarray(center_width, jnp.float32) - m_s) + m_s
    sw = jnp.abs(jnp.asarray(side_width, jnp.float32) - m_s) + m_s
    offset = cw * 0.5 + sw
    # z = s_eff * (d*(x - c) - offset) ;  tanh arg = z/2 = a*x + b
    a = 0.5 * s_eff * d
    b = -0.5 * s_eff * (d * jnp.asarray(c, jnp.float32) + offset)
    return jnp.stack([a, b]).astype(jnp.float32)  # (2,)


def joint_diff_sigmoid_edges_forward(x, mf_params, *, vmem_budget_bytes=24 * 1024 * 1024):
    """Fused forward for J JointDiffSigmoidEdgeMembFunc's sharing the same x.

    x: any shape/float dtype.  mf_params: list of dicts with keys
    (c, s, center_width, side_width, width_constrain, min_slope, right_side).
    Returns float32 array of shape (J, *x.shape).
    """
    num_mfs = len(mf_params)
    params = jnp.stack([_fold_affine_params(**p) for p in mf_params])  # (J, 2) f32

    orig_shape = x.shape
    xf = jnp.ravel(x).astype(jnp.float32)
    n = xf.shape[0]
    if n == 0:
        return jnp.zeros((num_mfs,) + orig_shape, jnp.float32)

    # ---- lane-dense layout (prefer rows >= 8 so vreg sublanes are packed) ----
    lane = None
    for cand in (1024, 512, 256, 128):
        if n % cand == 0 and n // cand >= 8:
            lane = cand
            break
    if lane is None:
        for cand in (128, 256, 512, 1024):
            if n % cand == 0:
                lane = cand
                break

    if lane is not None:
        # No pad, no output slice: grid uses cdiv + masked partial final block.
        rows = n // lane
        x2 = xf.reshape(rows, lane)
        tail_pad = 0
    else:
        # TODO(synk): truly ragged numel (not a multiple of 128) -> pad only the
        # tail; a fully copy-free ragged path would need in-kernel element masks.
        lane = 128 if n < 4096 else 512
        rows = pl.cdiv(n, lane)
        tail_pad = rows * lane - n
        x2 = jnp.pad(xf, (0, tail_pad)).reshape(rows, lane)

    # ---- row tiling from a VMEM budget (double-buffered x + J output slabs) --
    max_block_elems = max(8 * lane, vmem_budget_bytes // (4 * 2 * (1 + num_mfs)))
    max_tile_rows = min(1024, max(8, (max_block_elems // lane) // 8 * 8))
    if rows <= 8:
        tile_r = rows                      # single small block (full-dim block allowed)
    elif rows < 16:
        tile_r = 8
    else:
        # >= 2 grid steps so the parallel axis shards across both v7x TensorCores.
        tile_r = min(max_tile_rows, _round_up(pl.cdiv(rows, 2), 8))
    grid = (pl.cdiv(rows, tile_r),)

    out = pl.pallas_call(
        _edge_sigmoid_kernel,
        out_shape=jax.ShapeDtypeStruct((num_mfs, rows, lane), jnp.float32),
        grid_spec=pltpu.PrefetchScalarGridSpec(
            num_scalar_prefetch=1,
            grid=grid,
            in_specs=[pl.BlockSpec((tile_r, lane), lambda i, p: (i, 0))],
            out_specs=pl.BlockSpec((num_mfs, tile_r, lane), lambda i, p: (0, i, 0)),
        ),
        compiler_params=pltpu.CompilerParams(
            dimension_semantics=("parallel",),
            vmem_limit_bytes=32 * 1024 * 1024,
        ),
    )(params, x2)

    if tail_pad:
        out = out.reshape(num_mfs, rows * lane)[:, :n]
    return out.reshape((num_mfs,) + orig_shape)


def joint_diff_sigmoid_edge_forward(x, *, c, s, center_width, side_width,
                                    width_constrain, min_slope, right_side=False):
    """Pallas equivalent of a single JointDiffSigmoidEdgeMembFunc.forward."""
    out = joint_diff_sigmoid_edges_forward(
        x,
        [dict(c=c, s=s, center_width=center_width, side_width=side_width,
              width_constrain=width_constrain, min_slope=min_slope,
              right_side=right_side)],
    )
    return jnp.squeeze(out, axis=0)


def joint_diff_sigmoid_edge_ref(x, *, c, s, center_width, side_width,
                                width_constrain, min_slope, right_side=False):
    """Pure-JAX reference mirroring the PyTorch forward (in f32)."""
    d = 1.0 if right_side else -1.0
    s_eff = jnp.abs(jnp.float32(s) - jnp.float32(min_slope)) + jnp.float32(min_slope)
    m_s = jnp.float32(width_constrain) / s_eff
    cw = jnp.abs(jnp.float32(center_width) - m_s) + m_s
    sw = jnp.abs(jnp.float32(side_width) - m_s) + m_s
    e = jnp.exp(-s_eff * (d * (x.astype(jnp.float32) - jnp.float32(c)) - (cw / 2.0 + sw)))
    return (1.0 / (1.0 + e)).astype(jnp.float32)


if __name__ == "__main__":
    key = jax.random.PRNGKey(0)

    base = dict(c=0.5, s=1.5, center_width=0.8, side_width=0.3,
                width_constrain=1.0, min_slope=0.1)

    # ANFIS fuzzification input: a column vector of cases.
    n_cases = 1024
    x = jax.random.normal(key, (n_cases, 1), dtype=jnp.float32) * 2.0

    # ---- fused call: left edge + right edge evaluated in one pass over x ----
    mfs = [dict(base, right_side=False), dict(base, right_side=True)]
    y2 = jax.block_until_ready(joint_diff_sigmoid_edges_forward(x, mfs))
    assert y2.shape == (2,) + x.shape and y2.dtype == jnp.float32
    for j, mf in enumerate(mfs):
        y_ref = joint_diff_sigmoid_edge_ref(x, **mf)
        err = jnp.max(jnp.abs(y2[j] - y_ref))
        assert jnp.allclose(y2[j], y_ref, atol=1e-5, rtol=1e-5), f"fused mf {j}: {err}"

    # ---- single-MF API (matches the PyTorch module's forward) ---------------
    y1 = jax.block_until_ready(joint_diff_sigmoid_edge_forward(x, right_side=False, **base))
    assert y1.shape == x.shape and y1.dtype == jnp.float32
    assert jnp.allclose(y1, joint_diff_sigmoid_edge_ref(x, right_side=False, **base),
                        atol=1e-5, rtol=1e-5)

    # ---- multi-dim input (no pad / no slice path) ----------------------------
    x4 = jax.random.normal(jax.random.PRNGKey(1), (2, 4, 16, 16), dtype=jnp.float32)
    y4 = jax.block_until_ready(joint_diff_sigmoid_edge_forward(x4, right_side=True, **base))
    assert y4.shape == x4.shape
    assert jnp.allclose(y4, joint_diff_sigmoid_edge_ref(x4, right_side=True, **base),
                        atol=1e-5, rtol=1e-5)

    # ---- multi-step grid + partial final row block (fused, J=2) -------------
    x_big = jax.random.normal(jax.random.PRNGKey(2), (40, 512), dtype=jnp.float32)
    yb = jax.block_until_ready(joint_diff_sigmoid_edges_forward(x_big, mfs))
    for j, mf in enumerate(mfs):
        assert jnp.allclose(yb[j], joint_diff_sigmoid_edge_ref(x_big, **mf),
                            atol=1e-5, rtol=1e-5)

    # ---- ragged numel fallback (tail pad + slice) ----------------------------
    x_ragged = jax.random.normal(jax.random.PRNGKey(3), (1000,), dtype=jnp.float32)
    yr = jax.block_until_ready(joint_diff_sigmoid_edge_forward(x_ragged, right_side=False, **base))
    assert yr.shape == x_ragged.shape
    assert jnp.allclose(yr, joint_diff_sigmoid_edge_ref(x_ragged, right_side=False, **base),
                        atol=1e-5, rtol=1e-5)

    print("KERNEL_OK")
</pallas_src>

<mosaic_0001>
module attributes {stable_mosaic.version = 11 : i64} {
  func.func @_edge_sigmoid_kernel(%arg0: i32, %arg1: memref<2x2xf32, #tpu.memory_space<smem>>, %arg2: memref<8x128xf32, #tpu.memory_space<vmem>>, %arg3: memref<2x8x128xf32, #tpu.memory_space<vmem>>) attributes {dimension_semantics = [#tpu.dimension_semantics<parallel>], iteration_bounds = array<i64: 1>, scalar_prefetch = 1 : i64, scratch_operands = 0 : i64, tpu.core_type = #tpu.core_type<tc>, window_params = [{transform_indices = @transform_0, window_bounds = array<i64: 8, 128>}, {transform_indices = @transform_1, window_bounds = array<i64: 2, 8, 128>}]} {
    %c0 = arith.constant 0 : index
    %c0_0 = arith.constant 0 : index
    %0 = vector.load %arg2[%c0, %c0_0] : memref<8x128xf32, #tpu.memory_space<vmem>>, vector<8x128xf32>
    %c0_1 = arith.constant 0 : index
    %c0_2 = arith.constant 0 : index
    %1 = memref.load %arg1[%c0_1, %c0_2] : memref<2x2xf32, #tpu.memory_space<smem>>
    %c0_3 = arith.constant 0 : index
    %c1 = arith.constant 1 : index
    %2 = memref.load %arg1[%c0_3, %c1] : memref<2x2xf32, #tpu.memory_space<smem>>
    %3 = vector.broadcast %1 : f32 to vector<8x128xf32>
    %4 = arith.mulf %0, %3 : vector<8x128xf32>
    %5 = vector.broadcast %2 : f32 to vector<8x128xf32>
    %6 = arith.addf %4, %5 : vector<8x128xf32>
    %7 = math.tanh %6 : vector<8x128xf32>
    %cst = arith.constant 5.000000e-01 : f32
    %8 = vector.broadcast %cst : f32 to vector<8x128xf32>
    %9 = arith.mulf %8, %7 : vector<8x128xf32>
    %cst_4 = arith.constant 5.000000e-01 : f32
    %10 = vector.broadcast %cst_4 : f32 to vector<8x128xf32>
    %11 = arith.addf %9, %10 : vector<8x128xf32>
    %c0_5 = arith.constant 0 : index
    %c0_6 = arith.constant 0 : index
    %c0_7 = arith.constant 0 : index
    %12 = vector.load %arg3[%c0_5, %c0_6, %c0_7] : memref<2x8x128xf32, #tpu.memory_space<vmem>>, vector<1x8x128xf32>
    %13 = vector.shape_cast %12 : vector<1x8x128xf32> to vector<8x128xf32>
    %14 = vector.shape_cast %11 : vector<8x128xf32> to vector<1x8x128xf32>
    tpu.vector_store %arg3[%c0_5, %c0_6, %c0_7], %14 {strides = array<i32>} : memref<2x8x128xf32, #tpu.memory_space<vmem>>, vector<1x8x128xf32>,
    %c1_8 = arith.constant 1 : index
    %c0_9 = arith.constant 0 : index
    %15 = memref.load %arg1[%c1_8, %c0_9] : memref<2x2xf32, #tpu.memory_space<smem>>
    %c1_10 = arith.constant 1 : index
    %c1_11 = arith.constant 1 : index
    %16 = memref.load %arg1[%c1_10, %c1_11] : memref<2x2xf32, #tpu.memory_space<smem>>
    %17 = vector.broadcast %15 : f32 to vector<8x128xf32>
    %18 = arith.mulf %0, %17 : vector<8x128xf32>
    %19 = vector.broadcast %16 : f32 to vector<8x128xf32>
    %20 = arith.addf %18, %19 : vector<8x128xf32>
    %21 = math.tanh %20 : vector<8x128xf32>
    %cst_12 = arith.constant 5.000000e-01 : f32
    %22 = vector.broadcast %cst_12 : f32 to vector<8x128xf32>
    %23 = arith.mulf %22, %21 : vector<8x128xf32>
    %cst_13 = arith.constant 5.000000e-01 : f32
    %24 = vector.broadcast %cst_13 : f32 to vector<8x128xf32>
    %25 = arith.addf %23, %24 : vector<8x128xf32>
    %c1_14 = arith.constant 1 : index
    %c0_15 = arith.constant 0 : index
    %c0_16 = arith.constant 0 : index
    %26 = vector.load %arg3[%c1_14, %c0_15, %c0_16] : memref<2x8x128xf32, #tpu.memory_space<vmem>>, vector<1x8x128xf32>
    %27 = vector.shape_cast %26 : vector<1x8x128xf32> to vector<8x128xf32>
    %28 = vector.shape_cast %25 : vector<8x128xf32> to vector<1x8x128xf32>
    tpu.vector_store %arg3[%c1_14, %c0_15, %c0_16], %28 {strides = array<i32>} : memref<2x8x128xf32, #tpu.memory_space<vmem>>, vector<1x8x128xf32>,
    return
  }
  func.func @transform_0(%arg0: i32, %arg1: memref<2x2xf32, #tpu.memory_space<smem>>) -> (i32, i32) {
    %c0_i32 = arith.constant 0 : i32
    %c0_i32_0 = arith.constant 0 : i32
    return %arg0, %c0_i32 : i32, i32
  }
  func.func @transform_1(%arg0: i32, %arg1: memref<2x2xf32, #tpu.memory_space<smem>>) -> (i32, i32, i32) {
    %c0_i32 = arith.constant 0 : i32
    %c0_i32_0 = arith.constant 0 : i32
    %c0_i32_1 = arith.constant 0 : i32
    return %c0_i32, %arg0, %c0_i32_0 : i32, i32, i32
  }
}

</mosaic_0001>

<llo_original>
// kernel: tpu_custom_call.1
$region0: #{tpu_custom_call.1}
  #allocation0 [shape = 'u32[]', space=smem, size = 0x4, offset = 0x4, fixed_abs, tag = 'smem constant byte address 0x4 - core index']
  #allocation1 [shape = 'u32[144,128]{1,0:T(1,128)}', space=vmem, size = 0x12000, scoped, tag = 'internal scratch']
  #allocation2 [shape = 's32[1]{0}', space=sflag, size = 0x4, scoped, tag = 'scoped memory for tpu_custom_call.1']
  #allocation3 [shape = 'u8[1024]{0}', space=smem, size = 0x400, scoped, tag = 'prefetched SMEM operand 0']
  %s0 = inlined_call_operand.hbm [shape: f32[2,2], index: 0, kind: input, shape index: {}]
  %s1 = inlined_call_operand.hbm [shape: f32[8,128], index: 1, kind: input, shape index: {}]
  %s2 = inlined_call_operand.hbm [shape: f32[2,8,128], index: 2, kind: output, shape index: {}]
  %s3 = sld [smem:[#allocation0]]
  $region18: #{tpu_custom_call.1} parent=0
    _
  %s5 = ssub.s32 1, %s3
  %s6 = scalar_select 0, %s5, %s3
  %8 = dma.hbm_to_smem %s0, 32, [#allocation3], [#allocation2]
  %9 = dma.done [#allocation2], 32
  %10 = sfence
  $region1: #{tpu_custom_call.1} parent=0
    #allocation4 [shape = 'u8[4096]{0}', space=vmem, size = 0x1000, scoped, tag = 'input window, operand 1, single buffered']
    #allocation5 [shape = 's32[1]{0}', space=sflag, size = 0x4, scoped, tag = 'scoped memory for tpu_custom_call.1']
    #allocation6 [shape = 's32[1]{0}', space=sflag, size = 0x4, scoped, tag = 'scoped memory for tpu_custom_call.1']
    #allocation7 [shape = 'u8[8192]{0}', space=vmem, size = 0x2000, scoped, tag = 'output window, operand 0, single buffered']
    %11 = vsyncpa [#allocation5], 0
    %12 = vsyncpa [#allocation6], 0
    // Predicated region
    $region2: #{tpu_custom_call.1} parent=1 // pred_check
      _
    $region3: #{tpu_custom_call.1} parent=1 // pred_check_branch
      %14 = sbr.rel (0) target = $region5
    $region4: #{tpu_custom_call.1} parent=1 // pred_region
      %s16 = ssub.s32 128, 128
      %17 = vsyncadd [#allocation5], %s16
      %s19 = sshll.u32 [#allocation4], 4
      %s20 = int_to_ptr.vmem [resolvable:$true] %s19
      %22 = dma.hbm_to_vmem [thread:$0]  %s1, 128, %s20, [#allocation5]
    $region5: #{tpu_custom_call.1} parent=1 // pred_fallthru
      _
    // Predicated region
    $region6: #{tpu_custom_call.1} parent=1 // pred_check
      _
    $region7: #{tpu_custom_call.1} parent=1 // pred_check_branch
      %24 = sbr.rel (0) target = $region9
    $region8: #{tpu_custom_call.1} parent=1 // pred_region
      %25 = dma.done [#allocation5], 128
    $region9: #{tpu_custom_call.1} parent=1 // pred_fallthru
      _
    %v26 = vld [vmem:[#allocation4] sm:$0xff]
    %s27 = sld [smem:[#allocation3]]
    %s28 = sld [smem:[#allocation3 + $0x1]]
    %v29 = vstv %s27
    %v30 = vmul.f32 %v26, %v29
    %v31 = vstv %s28
    %v32 = vadd.f32 %v30, %v31
    %v33 = vtanh.pop %v32
    %v34 = vmul.f32 %v33, 0.5
    %v35 = vadd.f32 %v34, 0.5
    %36 = vst [vmem:[#allocation7] sm:$0xff] %v35
    %s37 = sld [smem:[#allocation3 + $0x80]]
    %s38 = sld [smem:[#allocation3 + $0x81]]
    %v39 = vstv %s37
    %v40 = vmul.f32 %v26, %v39
    %v41 = vstv %s38
    %v42 = vadd.f32 %v40, %v41
    %v43 = vtanh.pop %v42
    %v44 = vmul.f32 %v43, 0.5
    %v45 = vadd.f32 %v44, 0.5
    %s46 = scalar_lea.vmem [#allocation7], 8
    %47 = vst [vmem:[%s46] sm:$0xff] %v45
    // Predicated region
    $region10: #{tpu_custom_call.1} parent=1 // pred_check
      _
    $region11: #{tpu_custom_call.1} parent=1 // pred_check_branch
      %49 = sbr.rel (0) target = $region13
    $region12: #{tpu_custom_call.1} parent=1 // pred_region
      %s51 = ssub.s32 256, 256
      %52 = vsyncadd [#allocation6], %s51
      %s53 = sshll.u32 [#allocation7], 4
      %s54 = int_to_ptr.vmem [resolvable:$true] %s53
      %59 = dma.vmem_to_hbm [thread:$0]  %s54, 256, %s2, [#allocation6], 128, 128, 8
    $region13: #{tpu_custom_call.1} parent=1 // pred_fallthru
      _
    // Predicated region
    $region14: #{tpu_custom_call.1} parent=1 // pred_check
      _
    $region15: #{tpu_custom_call.1} parent=1 // pred_check_branch
      %61 = sbr.rel (0) target = $region17
    $region16: #{tpu_custom_call.1} parent=1 // pred_region
      %62 = dma.done [#allocation6], 256
    $region17: #{tpu_custom_call.1} parent=1 // pred_fallthru
      _
    %63 = vsyncpa [#allocation5], 1
    %64 = vsyncpa [#allocation6], 1

</llo_original>
